<compile_context>
chip_gen: v6e
topology: v6e:2x2x1
jax: 0.10.0
libtpu: 0.0.40
codegen_flags: <defaults>
</compile_context>

<pallas_src>
import jax
import jax.numpy as jnp
from jax.experimental import pallas as pl
from jax.experimental.pallas import tpu as pltpu


def _round_up(x, m):
    return ((x + m - 1) // m) * m


def _transpose_tile_kernel(x_ref, o_ref):
    # x_ref: (TN, TC) input tile, o_ref: (TC, TN) output tile (lane-dense).
    o_ref[...] = x_ref[...].T


def numpy_to_tensor(x, p=1.0):
    """Pallas implementation of NumpyToTensor.forward for p == 1.0.

    x: jnp.ndarray of shape (a, s, c)
    returns: jnp.ndarray of shape (c, a, s)
    """
    # TODO(synk): the p < 1.0 branch of the PyTorch module stochastically
    # skips the transform and returns a *differently shaped* array; that
    # data-dependent output shape has no clean JAX/Pallas equivalent, so only
    # the deterministic p=1.0 path (the module default) is implemented.
    assert p >= 1.0, "only the deterministic p=1.0 path is implemented"

    a, s, c = x.shape
    N = a * s

    # ---- tile-size selection -------------------------------------------------
    # Channel axis: keep the full extent when small (block dim == full array
    # dim satisfies the (8,128) rule); tile in multiples of 128 when large.
    if c <= 128:
        TC, c_pad = c, c
    else:
        TC = 256 if c >= 256 else 128
        c_pad = _round_up(c, TC)

    # Row axis (a*s): always a multiple of 128 so the *output* tile's lane
    # dimension is wide and unmasked. Bigger tiles for tiny c to amortize the
    # per-grid-step overhead; per-buffer VMEM stays <= ~2 MiB (f32).
    row_cap = 4096 if c <= 8 else 1024
    TN = min(_round_up(N, 128), row_cap)
    N_pad = _round_up(N, TN)

    # ---- layout glue (pure reshape / zero pad, no reordering) ---------------
    x2d = x.reshape(N, c)
    if (N_pad, c_pad) != (N, c):
        x2d = jnp.pad(x2d, ((0, N_pad - N), (0, c_pad - c)))

    grid = (N_pad // TN, c_pad // TC)

    out2d = pl.pallas_call(
        _transpose_tile_kernel,
        out_shape=jax.ShapeDtypeStruct((c_pad, N_pad), x.dtype),
        grid=grid,
        in_specs=[pl.BlockSpec((TN, TC), lambda i, j: (i, j))],
        out_specs=pl.BlockSpec((TC, TN), lambda i, j: (j, i)),
        compiler_params=pltpu.CompilerParams(
            dimension_semantics=("parallel", "parallel")),
    )(x2d)

    return out2d[:c, :N].reshape(c, a, s)


def _check(x):
    y = jax.block_until_ready(numpy_to_tensor(x, p=1.0))
    y_ref = jnp.transpose(x, (2, 0, 1))
    assert y.shape == y_ref.shape, (y.shape, y_ref.shape)
    assert jnp.allclose(y, y_ref), "mismatch vs rearrange('a s c -> c a s')"


if __name__ == "__main__":
    key = jax.random.PRNGKey(0)
    k1, k2, k3 = jax.random.split(key, 3)

    # Typical image-like case: tiny channel count, one padded row tile.
    x_small = jax.random.normal(k1, (2, 16, 4), dtype=jnp.float32)
    _check(x_small)

    # More rows than one tile (exercises the row grid + row padding), odd c.
    x_tall = jax.random.normal(k2, (65, 80, 3), dtype=jnp.float32)
    _check(x_tall)

    # Large channel count (exercises channel tiling + channel padding).
    x_wide_c = jax.random.normal(k3, (4, 64, 200), dtype=jnp.float32)
    _check(x_wide_c)

    print("KERNEL_OK")
</pallas_src>

<mosaic_0001>
module attributes {stable_mosaic.version = 11 : i64} {
  func.func @_transpose_tile_kernel(%arg0: i32, %arg1: i32, %arg2: memref<128x4xf32, #tpu.memory_space<vmem>>, %arg3: memref<4x128xf32, #tpu.memory_space<vmem>>) attributes {dimension_semantics = [#tpu.dimension_semantics<parallel>, #tpu.dimension_semantics<parallel>], iteration_bounds = array<i64: 1, 1>, scalar_prefetch = 0 : i64, scratch_operands = 0 : i64, tpu.core_type = #tpu.core_type<tc>, window_params = [{transform_indices = @transform_0, window_bounds = array<i64: 128, 4>}, {transform_indices = @transform_1, window_bounds = array<i64: 4, 128>}]} {
    %c0 = arith.constant 0 : index
    %c0_0 = arith.constant 0 : index
    %0 = vector.load %arg2[%c0, %c0_0] : memref<128x4xf32, #tpu.memory_space<vmem>>, vector<128x4xf32>
    %1 = tpu.transpose %0, [1, 0] : vector<128x4xf32> -> vector<4x128xf32>
    %c0_1 = arith.constant 0 : index
    %c0_2 = arith.constant 0 : index
    %2 = vector.load %arg3[%c0_1, %c0_2] : memref<4x128xf32, #tpu.memory_space<vmem>>, vector<4x128xf32>
    tpu.vector_store %arg3[%c0_1, %c0_2], %1 {strides = array<i32>} : memref<4x128xf32, #tpu.memory_space<vmem>>, vector<4x128xf32>,
    return
  }
  func.func @transform_0(%arg0: i32, %arg1: i32) -> (i32, i32) {
    %c0_i32 = arith.constant 0 : i32
    return %arg0, %arg1 : i32, i32
  }
  func.func @transform_1(%arg0: i32, %arg1: i32) -> (i32, i32) {
    %c0_i32 = arith.constant 0 : i32
    return %arg1, %arg0 : i32, i32
  }
}

</mosaic_0001>

<llo_original>
// kernel: tpu_custom_call.1
$region0: #{tpu_custom_call.1}
  #allocation0 [shape = 'u32[]', space=smem, size = 0x4, offset = 0x4, fixed_abs, tag = 'smem constant byte address 0x4 - core index']
  #allocation1 [shape = 'u32[144,128]{1,0:T(1,128)}', space=vmem, size = 0x12000, scoped, tag = 'internal scratch']
  %s0 = inlined_call_operand.vmem [shape: f32[128,4], index: 0, kind: input, shape index: {}]
  %s1 = inlined_call_operand.hbm [shape: f32[4,128], index: 1, kind: output, shape index: {}]
  %s2 = sld [smem:[#allocation0]]
  $region14: #{tpu_custom_call.1} parent=0
    _
  %s4 = ssub.s32 1, %s2
  %s5 = scalar_select 0, %s4, %s2
  $region1: #{tpu_custom_call.1} parent=0
    #allocation2 [shape = 'u8[2048]{0}', space=vmem, size = 0x800, scoped, tag = 'output window, operand 0, single buffered']
    #allocation3 [shape = 's32[1]{0}', space=sflag, size = 0x4, scoped, tag = 'scoped memory for tpu_custom_call.1']
    %6 = vsyncpa [#allocation3], 0
    // Predicated region
    $region2: #{tpu_custom_call.1} parent=1 // pred_check
      _
    $region3: #{tpu_custom_call.1} parent=1 // pred_check_branch
      %8 = sbr.rel (0) target = $region5
    $region4: #{tpu_custom_call.1} parent=1 // pred_region
      _
    $region5: #{tpu_custom_call.1} parent=1 // pred_fallthru
      _
    %v9 = vld [vmem:[%s0] sm:$0xff]
    %v10 = vld [vmem:[%s0 + $0x8] sm:$0xff]
    %v11 = vld [vmem:[%s0 + $0x10] sm:$0xff]
    %v12 = vld [vmem:[%s0 + $0x18] sm:$0xff]
    %v13 = vld [vmem:[%s0 + $0x20] sm:$0xff]
    %v14 = vld [vmem:[%s0 + $0x28] sm:$0xff]
    %v15 = vld [vmem:[%s0 + $0x30] sm:$0xff]
    %v16 = vld [vmem:[%s0 + $0x38] sm:$0xff]
    %v17 = vld [vmem:[%s0 + $0x40] sm:$0xff]
    %v18 = vld [vmem:[%s0 + $0x48] sm:$0xff]
    %v19 = vld [vmem:[%s0 + $0x50] sm:$0xff]
    %v20 = vld [vmem:[%s0 + $0x58] sm:$0xff]
    %v21 = vld [vmem:[%s0 + $0x60] sm:$0xff]
    %v22 = vld [vmem:[%s0 + $0x68] sm:$0xff]
    %v23 = vld [vmem:[%s0 + $0x70] sm:$0xff]
    %v24 = vld [vmem:[%s0 + $0x78] sm:$0xff]
    %25 = vxpose.xlu0.b32.start [1/16] %v9, 128
    %26 = vxpose.xlu0.b32.cont [2/16] %v10, 128
    %27 = vxpose.xlu0.b32.cont [3/16] %v11, 128
    %28 = vxpose.xlu0.b32.cont [4/16] %v12, 128
    %29 = vxpose.xlu0.b32.cont [5/16] %v13, 128
    %30 = vxpose.xlu0.b32.cont [6/16] %v14, 128
    %31 = vxpose.xlu0.b32.cont [7/16] %v15, 128
    %32 = vxpose.xlu0.b32.cont [8/16] %v16, 128
    %33 = vxpose.xlu0.b32.cont [9/16] %v17, 128
    %34 = vxpose.xlu0.b32.cont [10/16] %v18, 128
    %35 = vxpose.xlu0.b32.cont [11/16] %v19, 128
    %36 = vxpose.xlu0.b32.cont [12/16] %v20, 128
    %37 = vxpose.xlu0.b32.cont [13/16] %v21, 128
    %38 = vxpose.xlu0.b32.cont [14/16] %v22, 128
    %39 = vxpose.xlu0.b32.cont [15/16] %v23, 128
    %40 = vxpose.xlu0.b32.end [16/16] %v24, 128
    %v41 = vpop.trf.xlu0
    %v42 = vpop.trf.xlu0
    %v43 = vpop.trf.xlu0
    %v44 = vpop.trf.xlu0
    %v45 = vpop.trf.xlu0
    %v46 = vpop.trf.xlu0
    %v47 = vpop.trf.xlu0
    %v48 = vpop.trf.xlu0
    %v49 = vpop.trf.xlu0
    %v50 = vpop.trf.xlu0
    %v51 = vpop.trf.xlu0
    %v52 = vpop.trf.xlu0
    %v53 = vpop.trf.xlu0
    %v54 = vpop.trf.xlu0
    %v55 = vpop.trf.xlu0
    %v56 = vpop.trf.xlu0
    %57 = vst [vmem:[#allocation2] sm:$0xf] %v41
    // Predicated region
    $region6: #{tpu_custom_call.1} parent=1 // pred_check
      _
    $region7: #{tpu_custom_call.1} parent=1 // pred_check_branch
      %59 = sbr.rel (0) target = $region9
    $region8: #{tpu_custom_call.1} parent=1 // pred_region
      %s61 = ssub.s32 64, 64
      %62 = vsyncadd [#allocation3], %s61
      %s64 = sshll.u32 [#allocation2], 4
      %s65 = int_to_ptr.vmem [resolvable:$true] %s64
      %67 = dma.vmem_to_hbm [thread:$0]  %s65, 64, %s1, [#allocation3]
    $region9: #{tpu_custom_call.1} parent=1 // pred_fallthru
      _
    // Predicated region
    $region10: #{tpu_custom_call.1} parent=1 // pred_check
      _
    $region11: #{tpu_custom_call.1} parent=1 // pred_check_branch
      %69 = sbr.rel (0) target = $region13
    $region12: #{tpu_custom_call.1} parent=1 // pred_region
      %70 = dma.done [#allocation3], 64
    $region13: #{tpu_custom_call.1} parent=1 // pred_fallthru
      _
    %71 = vsyncpa [#allocation3], 1

</llo_original>
